<compile_context>
chip_gen: v7x
topology: tpu7x:2x2x1
jax: 0.10.0
libtpu: 0.0.40
codegen_flags: <defaults>
</compile_context>

<pallas_src>
from functools import partial

import jax
import jax.numpy as jnp
from jax.experimental import pallas as pl
from jax.experimental.pallas import tpu as pltpu

# ----------------------------- small test hyper-params ----------------------------
HIDDEN = 32          # hidden_size
PRED_NUM = 128       # prediction_num (>=128 so the output is lane-dense)
BATCH = 2
SEQLEN = 16
LN_EPS = 1e-5        # nn.LayerNorm default eps


# --------------------------------- Pallas kernel ----------------------------------
def _final_layer_kernel(x_ref, cond_ref, w_ada_ref, b_ada_ref,
                        w_lin_ref, b_lin_ref, o_ref, *, eps):
    B, S, H = x_ref.shape
    P = o_ref.shape[-1]

    # adaLN modulation: SiLU(condition) -> two (H, H) matmuls.  The stacked
    # weight/bias are indexed only along their leading axis (no lane slicing).
    cond = cond_ref[...]                                            # (B, H)
    silu = cond * jax.nn.sigmoid(cond)                              # sigmoid -> EUP slot
    shift = jnp.dot(silu, w_ada_ref[0],
                    preferred_element_type=jnp.float32) + b_ada_ref[0]   # (B, H)
    scale = jnp.dot(silu, w_ada_ref[1],
                    preferred_element_type=jnp.float32) + b_ada_ref[1]   # (B, H), (1+scale) folded in

    # LayerNorm over the last dim, no affine params (elementwise_affine=False).
    x = x_ref[...]                                                  # (B, S, H)
    mu = jnp.mean(x, axis=-1, keepdims=True)
    xc = x - mu
    var = jnp.mean(xc * xc, axis=-1, keepdims=True)
    normed = xc * jax.lax.rsqrt(var + eps)

    # Per-batch modulation, broadcast over the sequence (sublane) dim.
    # (+1 already folded into the scale bias in the wrapper.)
    out = normed * scale[:, None, :] + shift[:, None, :]            # (B, S, H)

    # Final projection: single fused (B*S, H) @ (H, P) MXU matmul,
    # lane-dense (P = 128) unmasked output store.  S is 8-aligned, so the
    # (B, S, H) -> (B*S, H) merge is a layout no-op.
    y = jnp.dot(out.reshape(B * S, H), w_lin_ref[...],
                preferred_element_type=jnp.float32) + b_lin_ref[...]     # (B*S, P)
    o_ref[...] = y


# ------------------------------------ wrapper --------------------------------------
def final_layer_forward(x, condition, w_ada, b_ada, w_lin, b_lin):
    """x: (B, S, H) f32; condition: (B, H) f32.

    Weights use PyTorch Linear layout (out_features, in_features):
      w_ada: (2H, H), b_ada: (2H,)   -- adaLN_modulation[1]
      w_lin: (P,  H), b_lin: (P,)    -- final linear
    """
    B, S, H = x.shape
    P = w_lin.shape[0]

    # Glue (traced once under jit; constant-folds for fixed weights):
    #   * transpose to (in, out), stack shift/scale halves -> one weight operand
    #   * fold the "+1" of the modulation into the scale bias
    #   * stack the two adaLN biases -> one bias operand
    w_ada_stacked = jnp.stack([w_ada[:H, :].T, w_ada[H:, :].T])     # (2, H, H)
    b_shift = b_ada[:H].reshape(1, H)
    b_scale = (b_ada[H:] + 1.0).reshape(1, H)                        # +1 folded here
    b_ada_stacked = jnp.stack([b_shift, b_scale])                    # (2, 1, H)
    w_lin_T = w_lin.T                                                # (H, P)
    b_lin_2d = b_lin.reshape(1, P)

    kernel = partial(_final_layer_kernel, eps=LN_EPS)
    vmem = lambda: pl.BlockSpec(memory_space=pltpu.MemorySpace.VMEM)

    # Everything fits comfortably in VMEM (<100 KiB on all of v5e/v6e/v7x) ->
    # single kernel invocation, no grid, no pipelining machinery, 7 DMA
    # descriptors total (6 in + 1 out).
    y = pl.pallas_call(
        kernel,
        out_shape=jax.ShapeDtypeStruct((B * S, P), jnp.float32),
        in_specs=[vmem() for _ in range(6)],
        out_specs=vmem(),
    )(x, condition, w_ada_stacked, b_ada_stacked, w_lin_T, b_lin_2d)

    # Free reshape outside the kernel (contiguous, handled by XLA).
    return y.reshape(B, S, P)


# ----------------------------------- reference --------------------------------------
def final_layer_reference(x, condition, w_ada, b_ada, w_lin, b_lin):
    H = x.shape[-1]
    mod = (condition * jax.nn.sigmoid(condition)) @ w_ada.T + b_ada   # (B, 2H)
    shift, scale = mod[:, :H], mod[:, H:]
    mu = x.mean(-1, keepdims=True)
    var = ((x - mu) ** 2).mean(-1, keepdims=True)
    normed = (x - mu) / jnp.sqrt(var + LN_EPS)
    out = normed * (1.0 + scale[:, None, :]) + shift[:, None, :]
    return out @ w_lin.T + b_lin


# -------------------------------------- main -----------------------------------------
if __name__ == "__main__":
    key = jax.random.PRNGKey(0)
    ks = jax.random.split(key, 4)

    x = jax.random.normal(ks[0], (BATCH, SEQLEN, HIDDEN), dtype=jnp.float32)
    condition = jax.random.normal(ks[1], (BATCH, HIDDEN), dtype=jnp.float32)

    # PyTorch Linear layout: (out_features, in_features).
    w_ada = jax.random.normal(ks[2], (2 * HIDDEN, HIDDEN), dtype=jnp.float32) * 0.05
    b_ada = 0.01 * jnp.arange(2 * HIDDEN, dtype=jnp.float32)
    w_lin = jax.random.normal(ks[3], (PRED_NUM, HIDDEN), dtype=jnp.float32) * 0.05
    b_lin = 0.02 * jnp.cos(jnp.arange(PRED_NUM, dtype=jnp.float32))

    out = final_layer_forward(x, condition, w_ada, b_ada, w_lin, b_lin)
    out = jax.block_until_ready(out)

    ref = final_layer_reference(x, condition, w_ada, b_ada, w_lin, b_lin)
    assert out.shape == (BATCH, SEQLEN, PRED_NUM)
    assert jnp.allclose(out, ref, atol=1e-4, rtol=1e-4), "mismatch vs JAX reference"

    print("KERNEL_OK")
</pallas_src>

<mosaic_0001>
module attributes {stable_mosaic.version = 11 : i64} {
  func.func @_final_layer_kernel(%arg0: memref<2x16x32xf32, #tpu.memory_space<vmem>>, %arg1: memref<2x32xf32, #tpu.memory_space<vmem>>, %arg2: memref<2x32x32xf32, #tpu.memory_space<vmem>>, %arg3: memref<2x1x32xf32, #tpu.memory_space<vmem>>, %arg4: memref<32x128xf32, #tpu.memory_space<vmem>>, %arg5: memref<1x128xf32, #tpu.memory_space<vmem>>, %arg6: memref<32x128xf32, #tpu.memory_space<vmem>>) attributes {dimension_semantics = [], scalar_prefetch = 0 : i64, scratch_operands = 0 : i64, tpu.core_type = #tpu.core_type<tc>} {
    %c0 = arith.constant 0 : index
    %c0_0 = arith.constant 0 : index
    %0 = vector.load %arg1[%c0, %c0_0] : memref<2x32xf32, #tpu.memory_space<vmem>>, vector<2x32xf32>
    %1 = arith.negf %0 : vector<2x32xf32>
    %2 = math.exp %1 : vector<2x32xf32>
    %cst = arith.constant 1.000000e+00 : f32
    %3 = vector.broadcast %cst : f32 to vector<2x32xf32>
    %4 = arith.addf %3, %2 : vector<2x32xf32>
    %5 = arith.divf %3, %4 : vector<2x32xf32>
    %6 = arith.mulf %0, %5 : vector<2x32xf32>
    %c0_1 = arith.constant 0 : index
    %c0_2 = arith.constant 0 : index
    %c0_3 = arith.constant 0 : index
    %7 = vector.load %arg2[%c0_1, %c0_2, %c0_3] : memref<2x32x32xf32, #tpu.memory_space<vmem>>, vector<1x32x32xf32>
    %8 = vector.shape_cast %7 : vector<1x32x32xf32> to vector<32x32xf32>
    %cst_4 = arith.constant dense<0.000000e+00> : vector<2x32xf32>
    %9 = tpu.matmul %6, %8, %cst_4 {dimension_numbers = #tpu.dot_dimension_numbers<[1], [0], [0], [1], [0, 0, 1, 1], [], []>} : vector<2x32xf32>, vector<32x32xf32>, vector<2x32xf32> -> vector<2x32xf32>
    %c0_5 = arith.constant 0 : index
    %c0_6 = arith.constant 0 : index
    %c0_7 = arith.constant 0 : index
    %10 = vector.load %arg3[%c0_5, %c0_6, %c0_7] : memref<2x1x32xf32, #tpu.memory_space<vmem>>, vector<1x1x32xf32>
    %11 = vector.shape_cast %10 : vector<1x1x32xf32> to vector<1x32xf32>
    %12 = vector.broadcast %11 : vector<1x32xf32> to vector<2x32xf32>
    %13 = arith.addf %9, %12 : vector<2x32xf32>
    %c1 = arith.constant 1 : index
    %c0_8 = arith.constant 0 : index
    %c0_9 = arith.constant 0 : index
    %14 = vector.load %arg2[%c1, %c0_8, %c0_9] : memref<2x32x32xf32, #tpu.memory_space<vmem>>, vector<1x32x32xf32>
    %15 = vector.shape_cast %14 : vector<1x32x32xf32> to vector<32x32xf32>
    %cst_10 = arith.constant dense<0.000000e+00> : vector<2x32xf32>
    %16 = tpu.matmul %6, %15, %cst_10 {dimension_numbers = #tpu.dot_dimension_numbers<[1], [0], [0], [1], [0, 0, 1, 1], [], []>} : vector<2x32xf32>, vector<32x32xf32>, vector<2x32xf32> -> vector<2x32xf32>
    %c1_11 = arith.constant 1 : index
    %c0_12 = arith.constant 0 : index
    %c0_13 = arith.constant 0 : index
    %17 = vector.load %arg3[%c1_11, %c0_12, %c0_13] : memref<2x1x32xf32, #tpu.memory_space<vmem>>, vector<1x1x32xf32>
    %18 = vector.shape_cast %17 : vector<1x1x32xf32> to vector<1x32xf32>
    %19 = vector.broadcast %18 : vector<1x32xf32> to vector<2x32xf32>
    %20 = arith.addf %16, %19 : vector<2x32xf32>
    %c0_14 = arith.constant 0 : index
    %c0_15 = arith.constant 0 : index
    %c0_16 = arith.constant 0 : index
    %21 = vector.load %arg0[%c0_14, %c0_15, %c0_16] : memref<2x16x32xf32, #tpu.memory_space<vmem>>, vector<2x16x32xf32>
    %cst_17 = arith.constant dense<0.000000e+00> : vector<2x16xf32>
    %22 = vector.multi_reduction <add>, %21, %cst_17 [2] : vector<2x16x32xf32> to vector<2x16xf32>
    %23 = vector.shape_cast %22 : vector<2x16xf32> to vector<2x16x1xf32>
    %cst_18 = arith.constant 3.200000e+01 : f32
    %24 = vector.broadcast %cst_18 : f32 to vector<2x16x1xf32>
    %25 = arith.divf %23, %24 : vector<2x16x1xf32>
    %26 = vector.broadcast %25 : vector<2x16x1xf32> to vector<2x16x32xf32>
    %27 = arith.subf %21, %26 : vector<2x16x32xf32>
    %28 = arith.mulf %27, %27 : vector<2x16x32xf32>
    %cst_19 = arith.constant dense<0.000000e+00> : vector<2x16xf32>
    %29 = vector.multi_reduction <add>, %28, %cst_19 [2] : vector<2x16x32xf32> to vector<2x16xf32>
    %30 = vector.shape_cast %29 : vector<2x16xf32> to vector<2x16x1xf32>
    %cst_20 = arith.constant 3.200000e+01 : f32
    %31 = vector.broadcast %cst_20 : f32 to vector<2x16x1xf32>
    %32 = arith.divf %30, %31 : vector<2x16x1xf32>
    %cst_21 = arith.constant 9.99999974E-6 : f32
    %33 = vector.broadcast %cst_21 : f32 to vector<2x16x1xf32>
    %34 = arith.addf %32, %33 : vector<2x16x1xf32>
    %35 = math.rsqrt %34 : vector<2x16x1xf32>
    %36 = vector.broadcast %35 : vector<2x16x1xf32> to vector<2x16x32xf32>
    %37 = arith.mulf %27, %36 : vector<2x16x32xf32>
    %38 = vector.shape_cast %20 : vector<2x32xf32> to vector<2x1x32xf32>
    %39 = vector.broadcast %38 : vector<2x1x32xf32> to vector<2x16x32xf32>
    %40 = arith.mulf %37, %39 : vector<2x16x32xf32>
    %41 = vector.shape_cast %13 : vector<2x32xf32> to vector<2x1x32xf32>
    %42 = vector.broadcast %41 : vector<2x1x32xf32> to vector<2x16x32xf32>
    %43 = arith.addf %40, %42 : vector<2x16x32xf32>
    %44 = vector.shape_cast %43 : vector<2x16x32xf32> to vector<32x32xf32>
    %c0_22 = arith.constant 0 : index
    %c0_23 = arith.constant 0 : index
    %45 = vector.load %arg4[%c0_22, %c0_23] : memref<32x128xf32, #tpu.memory_space<vmem>>, vector<32x128xf32>
    %cst_24 = arith.constant dense<0.000000e+00> : vector<32x128xf32>
    %46 = tpu.matmul %44, %45, %cst_24 {dimension_numbers = #tpu.dot_dimension_numbers<[1], [0], [0], [1], [0, 0, 1, 1], [], []>} : vector<32x32xf32>, vector<32x128xf32>, vector<32x128xf32> -> vector<32x128xf32>
    %c0_25 = arith.constant 0 : index
    %c0_26 = arith.constant 0 : index
    %47 = vector.load %arg5[%c0_25, %c0_26] : memref<1x128xf32, #tpu.memory_space<vmem>>, vector<1x128xf32>
    %48 = vector.broadcast %47 : vector<1x128xf32> to vector<32x128xf32>
    %49 = arith.addf %46, %48 : vector<32x128xf32>
    %c0_27 = arith.constant 0 : index
    %c0_28 = arith.constant 0 : index
    %50 = vector.load %arg6[%c0_27, %c0_28] : memref<32x128xf32, #tpu.memory_space<vmem>>, vector<32x128xf32>
    tpu.vector_store %arg6[%c0_27, %c0_28], %49 {strides = array<i32>} : memref<32x128xf32, #tpu.memory_space<vmem>>, vector<32x128xf32>,
    return
  }
}

</mosaic_0001>

<llo_original>
// kernel: tpu_custom_call.1
$region0: #{tpu_custom_call.1}
  #allocation0 [shape = 'u32[]', space=smem, size = 0x4, offset = 0x4, fixed_abs, tag = 'smem constant byte address 0x4 - core index']
  #allocation1 [shape = 'u32[144,128]{1,0:T(1,128)}', space=vmem, size = 0x12000, scoped, tag = 'internal scratch']
  %s0 = inlined_call_operand.hbm [shape: f32[2,16,32], index: 0, kind: input, shape index: {}]
  %s1 = inlined_call_operand.vmem [shape: f32[2,32], index: 1, kind: input, shape index: {}]
  %s2 = inlined_call_operand.hbm [shape: f32[2,32,32], index: 2, kind: input, shape index: {}]
  %s3 = inlined_call_operand.vmem [shape: f32[2,1,32], index: 3, kind: input, shape index: {}]
  %s4 = inlined_call_operand.hbm [shape: f32[32,128], index: 4, kind: input, shape index: {}]
  %s5 = inlined_call_operand.vmem [shape: f32[1,128], index: 5, kind: input, shape index: {}]
  %s6 = inlined_call_operand.hbm [shape: f32[32,128], index: 6, kind: output, shape index: {}]
  %s7 = sld [smem:[#allocation0]]
  $region46: #{tpu_custom_call.1} parent=0
    _
  %s9 = ssub.s32 1, %s7
  %s10 = scalar_select 0, %s9, %s7
  $region1: #{tpu_custom_call.1} parent=0
    #allocation2 [shape = 'u8[16384]{0}', space=vmem, size = 0x4000, scoped, tag = 'input window, operand 0, single buffered']
    #allocation3 [shape = 's32[1]{0}', space=sflag, size = 0x4, scoped, tag = 'scoped memory for tpu_custom_call.1']
    #allocation4 [shape = 's32[1]{0}', space=sflag, size = 0x4, scoped, tag = 'scoped memory for tpu_custom_call.1']
    #allocation5 [shape = 'u8[32768]{0}', space=vmem, size = 0x8000, scoped, tag = 'input window, operand 2, single buffered']
    #allocation6 [shape = 's32[1]{0}', space=sflag, size = 0x4, scoped, tag = 'scoped memory for tpu_custom_call.1']
    #allocation7 [shape = 'u8[16384]{0}', space=vmem, size = 0x4000, scoped, tag = 'input window, operand 4, single buffered']
    #allocation8 [shape = 'u8[16384]{0}', space=vmem, size = 0x4000, scoped, tag = 'output window, operand 0, single buffered']
    %11 = vsyncpa [#allocation3], 0
    %12 = vsyncpa [#allocation6], 0
    %13 = vsyncpa [#allocation4], 0
    // Predicated region
    $region2: #{tpu_custom_call.1} parent=1 // pred_check
      _
    $region3: #{tpu_custom_call.1} parent=1 // pred_check_branch
      %15 = sbr.rel (0) target = $region5
    $region4: #{tpu_custom_call.1} parent=1 // pred_region
      %s17 = ssub.s32 512, 512
      %18 = vsyncadd [#allocation3], %s17
      %s19 = sshll.u32 [#allocation2], 4
      %s20 = int_to_ptr.vmem [resolvable:$true] %s19
      %25 = dma.hbm_to_vmem [thread:$0]  %s0, 512, %s20, [#allocation3], 128, 128, 8
    $region5: #{tpu_custom_call.1} parent=1 // pred_fallthru
      _
    // Predicated region
    $region6: #{tpu_custom_call.1} parent=1 // pred_check
      _
    $region7: #{tpu_custom_call.1} parent=1 // pred_check_branch
      %27 = sbr.rel (0) target = $region9
    $region8: #{tpu_custom_call.1} parent=1 // pred_region
      _
    $region9: #{tpu_custom_call.1} parent=1 // pred_fallthru
      _
    // Predicated region
    $region10: #{tpu_custom_call.1} parent=1 // pred_check
      _
    $region11: #{tpu_custom_call.1} parent=1 // pred_check_branch
      %29 = sbr.rel (0) target = $region13
    $region12: #{tpu_custom_call.1} parent=1 // pred_region
      %s31 = ssub.s32 1024, 1024
      %32 = vsyncadd [#allocation6], %s31
      %s33 = sshll.u32 [#allocation5], 4
      %s34 = int_to_ptr.vmem [resolvable:$true] %s33
      %39 = dma.hbm_to_vmem [thread:$0]  %s2, 1024, %s34, [#allocation6], 128, 128, 8
    $region13: #{tpu_custom_call.1} parent=1 // pred_fallthru
      _
    // Predicated region
    $region14: #{tpu_custom_call.1} parent=1 // pred_check
      _
    $region15: #{tpu_custom_call.1} parent=1 // pred_check_branch
      %41 = sbr.rel (0) target = $region17
    $region16: #{tpu_custom_call.1} parent=1 // pred_region
      _
    $region17: #{tpu_custom_call.1} parent=1 // pred_fallthru
      _
    // Predicated region
    $region18: #{tpu_custom_call.1} parent=1 // pred_check
      _
    $region19: #{tpu_custom_call.1} parent=1 // pred_check_branch
      %43 = sbr.rel (0) target = $region21
    $region20: #{tpu_custom_call.1} parent=1 // pred_region
      %s45 = ssub.s32 512, 512
      %46 = vsyncadd [#allocation6], %s45
      %s47 = sshll.u32 [#allocation7], 4
      %s48 = int_to_ptr.vmem [resolvable:$true] %s47
      %53 = dma.hbm_to_vmem [thread:$0]  %s4, 512, %s48, [#allocation6], 128, 128, 8
    $region21: #{tpu_custom_call.1} parent=1 // pred_fallthru
      _
    // Predicated region
    $region22: #{tpu_custom_call.1} parent=1 // pred_check
      _
    $region23: #{tpu_custom_call.1} parent=1 // pred_check_branch
      %55 = sbr.rel (0) target = $region25
    $region24: #{tpu_custom_call.1} parent=1 // pred_region
      _
    $region25: #{tpu_custom_call.1} parent=1 // pred_fallthru
      _
    // Predicated region
    $region26: #{tpu_custom_call.1} parent=1 // pred_check
      _
    $region27: #{tpu_custom_call.1} parent=1 // pred_check_branch
      %57 = sbr.rel (0) target = $region29
    $region28: #{tpu_custom_call.1} parent=1 // pred_region
      %58 = dma.done [#allocation3], 512
    $region29: #{tpu_custom_call.1} parent=1 // pred_fallthru
      _
    // Predicated region
    $region30: #{tpu_custom_call.1} parent=1 // pred_check
      _
    $region31: #{tpu_custom_call.1} parent=1 // pred_check_branch
      %60 = sbr.rel (0) target = $region33
    $region32: #{tpu_custom_call.1} parent=1 // pred_region
      %61 = dma.done [#allocation6], 1024
    $region33: #{tpu_custom_call.1} parent=1 // pred_fallthru
      _
    // Predicated region
    $region34: #{tpu_custom_call.1} parent=1 // pred_check
      _
    $region35: #{tpu_custom_call.1} parent=1 // pred_check_branch
      %63 = sbr.rel (0) target = $region37
    $region36: #{tpu_custom_call.1} parent=1 // pred_region
      %64 = dma.done [#allocation6], 512
    $region37: #{tpu_custom_call.1} parent=1 // pred_fallthru
      _
    %v65 = vld [vmem:[%s1] sm:$0x3]
    %v66 = vxor.u32 %v65, 2147483648
    %v67 = vmul.f32 %v66, 1.442695
    %v68 = vpow.pop %v67
    %v69 = vadd.f32 %v68, 1.0
    %v70 = vrcp.pop %v69
    %v71 = vmul.f32 1.0, %v70
    %v72 = vmul.f32 %v65, %v71
    %v73 = vld [vmem:[#allocation5] sm:$0xff]
    %v74 = vld [vmem:[#allocation5 + $0x8] sm:$0xff]
    %v75 = vld [vmem:[#allocation5 + $0x10] sm:$0xff]
    %v76 = vld [vmem:[#allocation5 + $0x18] sm:$0xff]
    %v77 = vld [vmem:[%s3] sm:$0x1]
    %v79 = vlaneseq
    %v80 = vshrl.u32 %v79, 7
    %v81 = vsub.s32 0, %v80
    %v82 = vrot.slane %v77, %v81
    %vm84 = vcmask 261120
    %v86 = vsel %vm84, %v72, 0
    %88 = vmatprep.subr.mxu0 0.0
    %89 = vmatpush1.msra.mxu0 %v73
    %90 = vmatprep.subr.mxu0 0.0
    %91 = vmatpush1.msra.mxu0 %v74
    %92 = vmatprep.subr.mxu0 0.0
    %93 = vmatpush1.msra.mxu0 %v75
    %94 = vmatprep.subr.mxu0 0.0
    %95 = vmatpush1.msra.mxu0 %v76
    %96 = vmatprep.subr.mxu0 0.0
    %97 = vmatpush1.msra.mxu0 0.0
    %98 = vmatprep.subr.mxu0 0.0
    %99 = vmatpush1.msra.mxu0 0.0
    %100 = vmatprep.subr.mxu0 0.0
    %101 = vmatpush1.msra.mxu0 0.0
    %102 = vmatprep.subr.mxu0 0.0
    %103 = vmatpush1.msra.mxu0 0.0
    %104 = vmatprep.subr.mxu0 0.0
    %105 = vmatpush1.msra.mxu0 0.0
    %106 = vmatprep.subr.mxu0 0.0
    %107 = vmatpush1.msra.mxu0 0.0
    %108 = vmatprep.subr.mxu0 0.0
    %109 = vmatpush1.msra.mxu0 0.0
    %110 = vmatprep.subr.mxu0 0.0
    %111 = vmatpush1.msra.mxu0 0.0
    %112 = vmatprep.subr.mxu0 0.0
    %113 = vmatpush1.msra.mxu0 0.0
    %114 = vmatprep.subr.mxu0 0.0
    %115 = vmatpush1.msra.mxu0 0.0
    %116 = vmatprep.subr.mxu0 0.0
    %117 = vmatpush1.msra.mxu0 0.0
    %118 = vmatprep.subr.mxu0 0.0
    %119 = vmatpush1.msra.mxu0 0.0
    %120 = vmatprep.subr.mxu0 0.0
    %121 = vmatpush1.msra.mxu0 0.0
    %122 = vmatprep.subr.mxu0 0.0
    %123 = vmatpush1.msra.mxu0 0.0
    %124 = vmatprep.subr.mxu0 0.0
    %125 = vmatpush1.msra.mxu0 0.0
    %126 = vmatprep.subr.mxu0 0.0
    %127 = vmatpush1.msra.mxu0 0.0
    %128 = vmatprep.subr.mxu0 0.0
    %129 = vmatpush1.msra.mxu0 0.0
    %130 = vmatprep.subr.mxu0 0.0
    %131 = vmatpush1.msra.mxu0 0.0
    %132 = vmatprep.subr.mxu0 0.0
    %133 = vmatpush1.msra.mxu0 0.0
    %134 = vmatprep.subr.mxu0 0.0
    %135 = vmatpush1.msra.mxu0 0.0
    %136 = vmatprep.subr.mxu0 0.0
    %137 = vmatpush1.msra.mxu0 0.0
    %138 = vmatprep.subr.mxu0 0.0
    %139 = vmatpush1.msra.mxu0 0.0
    %140 = vmatprep.subr.mxu0 0.0
    %141 = vmatpush1.msra.mxu0 0.0
    %142 = vmatprep.subr.mxu0 0.0
    %143 = vmatpush1.msra.mxu0 0.0
    %144 = vmatprep.subr.mxu0 0.0
    %145 = vmatpush1.msra.mxu0 0.0
    %146 = vmatprep.subr.mxu0 0.0
    %147 = vmatpush1.msra.mxu0 0.0
    %148 = vmatprep.subr.mxu0 0.0
    %149 = vmatpush1.msra.mxu0 0.0
    %150 = vmatprep.subr.mxu0 0.0
    %151 = vmatpush1.msra.mxu0 0.0
    %152 = vmatprep.mubr.f32.mxu0 0.0
    %153 = vmatmul.mubr.f32.gmra.mrb[0].mxu0 %v86
    %v154 = vpop.f32.mrb[0].mxu0
    %v155 = vadd.f32 %v82, %v154
    %v156 = vpop.f32.mrb[0].mxu0
    %157 = vdwg.mxu0
    %s158 = scalar_lea.vmem [#allocation5], 32
    %v159 = vld [vmem:[%s158] sm:$0xff]
    %v160 = vld [vmem:[%s158 + $0x8] sm:$0xff]
    %v161 = vld [vmem:[%s158 + $0x10] sm:$0xff]
    %v162 = vld [vmem:[%s158 + $0x18] sm:$0xff]
    %s163 = scalar_lea.vmem %s3, 1
    %v164 = vld [vmem:[%s163] sm:$0x1]
    %v166 = vlaneseq
    %v167 = vshrl.u32 %v166, 7
    %v168 = vsub.s32 0, %v167
    %v169 = vrot.slane %v164, %v168
    %171 = vmatprep.subr.mxu0 0.0
    %172 = vmatpush1.msra.mxu0 %v159
    %173 = vmatprep.subr.mxu0 0.0
    %174 = vmatpush1.msra.mxu0 %v160
    %175 = vmatprep.subr.mxu0 0.0
    %176 = vmatpush1.msra.mxu0 %v161
    %177 = vmatprep.subr.mxu0 0.0
    %178 = vmatpush1.msra.mxu0 %v162
    %179 = vmatprep.subr.mxu0 0.0
    %180 = vmatpush1.msra.mxu0 0.0
    %181 = vmatprep.subr.mxu0 0.0
    %182 = vmatpush1.msra.mxu0 0.0
    %183 = vmatprep.subr.mxu0 0.0
    %184 = vmatpush1.msra.mxu0 0.0
    %185 = vmatprep.subr.mxu0 0.0
    %186 = vmatpush1.msra.mxu0 0.0
    %187 = vmatprep.subr.mxu0 0.0
    %188 = vmatpush1.msra.mxu0 0.0
    %189 = vmatprep.subr.mxu0 0.0
    %190 = vmatpush1.msra.mxu0 0.0
    %191 = vmatprep.subr.mxu0 0.0
    %192 = vmatpush1.msra.mxu0 0.0
    %193 = vmatprep.subr.mxu0 0.0
    %194 = vmatpush1.msra.mxu0 0.0
    %195 = vmatprep.subr.mxu0 0.0
    %196 = vmatpush1.msra.mxu0 0.0
    %197 = vmatprep.subr.mxu0 0.0
    %198 = vmatpush1.msra.mxu0 0.0
    %199 = vmatprep.subr.mxu0 0.0
    %200 = vmatpush1.msra.mxu0 0.0
    %201 = vmatprep.subr.mxu0 0.0
    %202 = vmatpush1.msra.mxu0 0.0
    %203 = vmatprep.subr.mxu0 0.0
    %204 = vmatpush1.msra.mxu0 0.0
    %205 = vmatprep.subr.mxu0 0.0
    %206 = vmatpush1.msra.mxu0 0.0
    %207 = vmatprep.subr.mxu0 0.0
    %208 = vmatpush1.msra.mxu0 0.0
    %209 = vmatprep.subr.mxu0 0.0
    %210 = vmatpush1.msra.mxu0 0.0
    %211 = vmatprep.subr.mxu0 0.0
    %212 = vmatpush1.msra.mxu0 0.0
    %213 = vmatprep.subr.mxu0 0.0
    %214 = vmatpush1.msra.mxu0 0.0
    %215 = vmatprep.subr.mxu0 0.0
    %216 = vmatpush1.msra.mxu0 0.0
    %217 = vmatprep.subr.mxu0 0.0
    %218 = vmatpush1.msra.mxu0 0.0
    %219 = vmatprep.subr.mxu0 0.0
    %220 = vmatpush1.msra.mxu0 0.0
    %221 = vmatprep.subr.mxu0 0.0
    %222 = vmatpush1.msra.mxu0 0.0
    %223 = vmatprep.subr.mxu0 0.0
    %224 = vmatpush1.msra.mxu0 0.0
    %225 = vmatprep.subr.mxu0 0.0
    %226 = vmatpush1.msra.mxu0 0.0
    %227 = vmatprep.subr.mxu0 0.0
    %228 = vmatpush1.msra.mxu0 0.0
    %229 = vmatprep.subr.mxu0 0.0
    %230 = vmatpush1.msra.mxu0 0.0
    %231 = vmatprep.subr.mxu0 0.0
    %232 = vmatpush1.msra.mxu0 0.0
    %233 = vmatprep.subr.mxu0 0.0
    %234 = vmatpush1.msra.mxu0 0.0
    %235 = vmatprep.mubr.f32.mxu0 0.0
    %236 = vmatmul.mubr.f32.gmra.mrb[0].mxu0 %v86
    %v237 = vpop.f32.mrb[0].mxu0
    %v238 = vadd.f32 %v169, %v237
    %v239 = vpop.f32.mrb[0].mxu0
    %240 = vdwg.mxu0
    %v241 = vld [vmem:[#allocation2] sm:$0xff]
    %v242 = vld [vmem:[#allocation2 + $0x8] sm:$0xff]
    %v243 = vld [vmem:[#allocation2 + $0x10] sm:$0xff]
    %v244 = vld [vmem:[#allocation2 + $0x18] sm:$0xff]
    %v245 = vsel %vm84, %v241, 0.0
    %246 = vadd.xlane.f32.xlu0 %v245
    %v247 = vpop.xlane.xlu0 %246
    %v248 = vsel %vm84, %v242, 0.0
    %249 = vadd.xlane.f32.xlu0 %v248
    %v250 = vpop.xlane.xlu0 %249
    %v251 = vsel %vm84, %v243, 0.0
    %252 = vadd.xlane.f32.xlu0 %v251
    %v253 = vpop.xlane.xlu0 %252
    %v254 = vsel %vm84, %v244, 0.0
    %255 = vadd.xlane.f32.xlu0 %v254
    %v256 = vpop.xlane.xlu0 %255
    %v257 = vrcp.pop 32.0
    %v258 = vmul.f32 %v247, %v257
    %v259 = vmul.f32 %v250, %v257
    %v260 = vmul.f32 %v253, %v257
    %v261 = vmul.f32 %v256, %v257
    %v262 = vsub.f32 %v241, %v258
    %v263 = vsub.f32 %v242, %v259
    %v264 = vsub.f32 %v243, %v260
    %v265 = vsub.f32 %v244, %v261
    %v266 = vmul.f32 %v262, %v262
    %v267 = vmul.f32 %v263, %v263
    %v268 = vmul.f32 %v264, %v264
    %v269 = vmul.f32 %v265, %v265
    %v270 = vsel %vm84, %v266, 0.0
    %271 = vadd.xlane.f32.xlu0 %v270
    %v272 = vpop.xlane.xlu0 %271
    %v273 = vsel %vm84, %v267, 0.0
    %274 = vadd.xlane.f32.xlu0 %v273
    %v275 = vpop.xlane.xlu0 %274
    %v276 = vsel %vm84, %v268, 0.0
    %277 = vadd.xlane.f32.xlu0 %v276
    %v278 = vpop.xlane.xlu0 %277
    %v279 = vsel %vm84, %v269, 0.0
    %280 = vadd.xlane.f32.xlu0 %v279
    %v281 = vpop.xlane.xlu0 %280
    %v282 = vmul.f32 %v272, %v257
    %v283 = vmul.f32 %v275, %v257
    %v284 = vmul.f32 %v278, %v257
    %v285 = vmul.f32 %v281, %v257
    %v286 = vadd.f32 %v282, 1e-05
    %v287 = vadd.f32 %v283, 1e-05
    %v288 = vadd.f32 %v284, 1e-05
    %v289 = vadd.f32 %v285, 1e-05
    %v290 = vrsqrt.pop %v286
    %v291 = vrsqrt.pop %v287
    %v292 = vrsqrt.pop %v288
    %v293 = vrsqrt.pop %v289
    %v294 = vmul.f32 %v262, %v290
    %v295 = vmul.f32 %v263, %v291
    %v296 = vmul.f32 %v264, %v292
    %v297 = vmul.f32 %v265, %v293
    %v300 = vunpack.c.l.s4 1966171168
    %v301 = vunpack.c.0.s8 %v300
    %v302 = vlaneseq
    %v303 = vshrl.u32 %v302, 7
    %v304 = vsub.s32 %v301, %v303
    %v305 = vrot.slane %v238, %v304
    %v306 = vcombine.high %v305, %v305
    %v308 = vunpack.c.l.s4 1966171168
    %v309 = vunpack.c.0.s8 %v308
    %v310 = vlaneseq
    %v311 = vshrl.u32 %v310, 7
    %v312 = vsub.s32 %v309, %v311
    %v313 = vrot.slane %v305, %v312
    %v315 = vunpack.c.l.s4 1966171168
    %v316 = vunpack.c.0.s8 %v315
    %v317 = vlaneseq
    %v318 = vshrl.u32 %v317, 7
    %v319 = vsub.s32 %v316, %v318
    %v320 = vrot.slane %v306, %v319
    %v321 = vlaneseq
    %v322 = vshrl.u32 %v321, 7
    %v323 = vsub.s32 0, %v322
    %v324 = vrot.slane %v313, %v323
    %v325 = vlaneseq
    %v326 = vshrl.u32 %v325, 7
    %v327 = vsub.s32 0, %v326
    %v328 = vrot.slane %v320, %v327
    %v331 = vmul.f32 %v294, %v324
    %v332 = vmul.f32 %v295, %v324
    %v333 = vmul.f32 %v296, %v328
    %v334 = vmul.f32 %v297, %v328
    %v337 = vunpack.c.l.s4 1966171168
    %v338 = vunpack.c.0.s8 %v337
    %v339 = vlaneseq
    %v340 = vshrl.u32 %v339, 7
    %v341 = vsub.s32 %v338, %v340
    %v342 = vrot.slane %v155, %v341
    %v343 = vcombine.high %v342, %v342
    %v345 = vunpack.c.l.s4 1966171168
    %v346 = vunpack.c.0.s8 %v345
    %v347 = vlaneseq
    %v348 = vshrl.u32 %v347, 7
    %v349 = vsub.s32 %v346, %v348
    %v350 = vrot.slane %v342, %v349
    %v352 = vunpack.c.l.s4 1966171168
    %v353 = vunpack.c.0.s8 %v352
    %v354 = vlaneseq
    %v355 = vshrl.u32 %v354, 7
    %v356 = vsub.s32 %v353, %v355
    %v357 = vrot.slane %v343, %v356
    %v358 = vlaneseq
    %v359 = vshrl.u32 %v358, 7
    %v360 = vsub.s32 0, %v359
    %v361 = vrot.slane %v350, %v360
    %v362 = vlaneseq
    %v363 = vshrl.u32 %v362, 7
    %v364 = vsub.s32 0, %v363
    %v365 = vrot.slane %v357, %v364
    %v368 = vadd.f32 %v331, %v361
    %v369 = vadd.f32 %v332, %v361
    %v370 = vadd.f32 %v333, %v365
    %v371 = vadd.f32 %v334, %v365
    %v372 = vld [vmem:[#allocation7] sm:$0xff]
    %v373 = vld [vmem:[#allocation7 + $0x8] sm:$0xff]
    %v374 = vld [vmem:[#allocation7 + $0x10] sm:$0xff]
    %v375 = vld [vmem:[#allocation7 + $0x18] sm:$0xff]
    %v376 = vld [vmem:[%s5] sm:$0x1]
    %v378 = vlaneseq
    %v379 = vshrl.u32 %v378, 7
    %v380 = vsub.s32 0, %v379
    %v381 = vrot.slane %v376, %v380
    %v384 = vsel %vm84, %v368, 0
    %v387 = vsel %vm84, %v369, 0
    %v390 = vsel %vm84, %v370, 0
    %v393 = vsel %vm84, %v371, 0
    %395 = vmatprep.subr.mxu0 0.0
    %396 = vmatpush1.msra.mxu0 %v372
    %397 = vmatprep.subr.mxu0 0.0
    %398 = vmatpush1.msra.mxu0 %v373
    %399 = vmatprep.subr.mxu0 0.0
    %400 = vmatpush1.msra.mxu0 %v374
    %401 = vmatprep.subr.mxu0 0.0
    %402 = vmatpush1.msra.mxu0 %v375
    %403 = vmatprep.subr.mxu0 0.0
    %404 = vmatpush1.msra.mxu0 0.0
    %405 = vmatprep.subr.mxu0 0.0
    %406 = vmatpush1.msra.mxu0 0.0
    %407 = vmatprep.subr.mxu0 0.0
    %408 = vmatpush1.msra.mxu0 0.0
    %409 = vmatprep.subr.mxu0 0.0
    %410 = vmatpush1.msra.mxu0 0.0
    %411 = vmatprep.subr.mxu0 0.0
    %412 = vmatpush1.msra.mxu0 0.0
    %413 = vmatprep.subr.mxu0 0.0
    %414 = vmatpush1.msra.mxu0 0.0
    %415 = vmatprep.subr.mxu0 0.0
    %416 = vmatpush1.msra.mxu0 0.0
    %417 = vmatprep.subr.mxu0 0.0
    %418 = vmatpush1.msra.mxu0 0.0
    %419 = vmatprep.subr.mxu0 0.0
    %420 = vmatpush1.msra.mxu0 0.0
    %421 = vmatprep.subr.mxu0 0.0
    %422 = vmatpush1.msra.mxu0 0.0
    %423 = vmatprep.subr.mxu0 0.0
    %424 = vmatpush1.msra.mxu0 0.0
    %425 = vmatprep.subr.mxu0 0.0
    %426 = vmatpush1.msra.mxu0 0.0
    %427 = vmatprep.subr.mxu0 0.0
    %428 = vmatpush1.msra.mxu0 0.0
    %429 = vmatprep.subr.mxu0 0.0
    %430 = vmatpush1.msra.mxu0 0.0
    %431 = vmatprep.subr.mxu0 0.0
    %432 = vmatpush1.msra.mxu0 0.0
    %433 = vmatprep.subr.mxu0 0.0
    %434 = vmatpush1.msra.mxu0 0.0
    %435 = vmatprep.subr.mxu0 0.0
    %436 = vmatpush1.msra.mxu0 0.0
    %437 = vmatprep.subr.mxu0 0.0
    %438 = vmatpush1.msra.mxu0 0.0
    %439 = vmatprep.subr.mxu0 0.0
    %440 = vmatpush1.msra.mxu0 0.0
    %441 = vmatprep.subr.mxu0 0.0
    %442 = vmatpush1.msra.mxu0 0.0
    %443 = vmatprep.subr.mxu0 0.0
    %444 = vmatpush1.msra.mxu0 0.0
    %445 = vmatprep.subr.mxu0 0.0
    %446 = vmatpush1.msra.mxu0 0.0
    %447 = vmatprep.subr.mxu0 0.0
    %448 = vmatpush1.msra.mxu0 0.0
    %449 = vmatprep.subr.mxu0 0.0
    %450 = vmatpush1.msra.mxu0 0.0
    %451 = vmatprep.subr.mxu0 0.0
    %452 = vmatpush1.msra.mxu0 0.0
    %453 = vmatprep.subr.mxu0 0.0
    %454 = vmatpush1.msra.mxu0 0.0
    %455 = vmatprep.subr.mxu0 0.0
    %456 = vmatpush1.msra.mxu0 0.0
    %457 = vmatprep.subr.mxu0 0.0
    %458 = vmatpush1.msra.mxu0 0.0
    %459 = vmatprep.mubr.f32.mxu0 0.0
    %460 = vmatmul.mubr.f32.gmra.mrb[0].mxu0 %v384
    %v461 = vpop.f32.mrb[0].mxu0
    %v462 = vadd.f32 %v381, %v461
    %v463 = vpop.f32.mrb[0].mxu0
    %464 = vmatprep.mubr.f32.mxu0 0.0
    %465 = vmatmul.mubr.f32.gmra.mrb[0].mxu0 %v387
    %v466 = vpop.f32.mrb[0].mxu0
    %v467 = vadd.f32 %v381, %v466
    %v468 = vpop.f32.mrb[0].mxu0
    %469 = vmatprep.mubr.f32.mxu0 0.0
    %470 = vmatmul.mubr.f32.gmra.mrb[0].mxu0 %v390
    %v471 = vpop.f32.mrb[0].mxu0
    %v472 = vadd.f32 %v381, %v471
    %v473 = vpop.f32.mrb[0].mxu0
    %474 = vmatprep.mubr.f32.mxu0 0.0
    %475 = vmatmul.mubr.f32.gmra.mrb[0].mxu0 %v393
    %v476 = vpop.f32.mrb[0].mxu0
    %v477 = vadd.f32 %v381, %v476
    %v478 = vpop.f32.mrb[0].mxu0
    %479 = vdwg.mxu0
    %480 = vst [vmem:[#allocation8] sm:$0xff] %v462
    %481 = vst [vmem:[#allocation8 + $0x8] sm:$0xff] %v467
    %482 = vst [vmem:[#allocation8 + $0x10] sm:$0xff] %v472
    %483 = vst [vmem:[#allocation8 + $0x18] sm:$0xff] %v477
    // Predicated region
    $region38: #{tpu_custom_call.1} parent=1 // pred_check
      _
    $region39: #{tpu_custom_call.1} parent=1 // pred_check_branch
      %485 = sbr.rel (0) target = $region41
    $region40: #{tpu_custom_call.1} parent=1 // pred_region
      %s487 = ssub.s32 512, 512
      %488 = vsyncadd [#allocation4], %s487
      %s489 = sshll.u32 [#allocation8], 4
      %s490 = int_to_ptr.vmem [resolvable:$true] %s489
      %495 = dma.vmem_to_hbm [thread:$0]  %s490, 512, %s6, [#allocation4], 128, 128, 8
    $region41: #{tpu_custom_call.1} parent=1 // pred_fallthru
      _
    // Predicated region
    $region42: #{tpu_custom_call.1} parent=1 // pred_check
      _
    $region43: #{tpu_custom_call.1} parent=1 // pred_check_branch
      %497 = sbr.rel (0) target = $region45
    $region44: #{tpu_custom_call.1} parent=1 // pred_region
      %498 = dma.done [#allocation4], 512
    $region45: #{tpu_custom_call.1} parent=1 // pred_fallthru
      _
    %499 = vsyncpa [#allocation3], 1
    %500 = vsyncpa [#allocation6], 1
    %501 = vsyncpa [#allocation4], 1

</llo_original>
